<compile_context>
chip_gen: v5e
topology: v5e:2x2
jax: 0.10.0
libtpu: 0.0.40
codegen_flags: <defaults>
</compile_context>

<pallas_src>
import jax
import jax.numpy as jnp
from jax import lax
from jax.experimental import pallas as pl
from jax.experimental.pallas import tpu as pltpu

BN_EPS = 1e-5
LEAKY_SLOPE = 0.1


def _conv_stats_kernel(xcol_ref, w_ref, conv_ref, stats_ref):
    """Phase 1: conv tile + per-channel partial BN statistics.

    xcol_ref:  (9*Cin, tile_nhw)     im2col activation chunk (mxu_dtype)
    w_ref:     (tile_cout, 9*Cin)    fused per-tap conv weights (mxu_dtype)
    conv_ref:  (tile_cout, tile_nhw) conv output tile (store_dtype)
    stats_ref: (1, tile_cout, 2)     [sum, sum_of_squares] for this tile (f32)
    """
    # conv3x3 (padding=1, stride=1, no bias) as ONE MXU matmul with K = 9*Cin.
    acc = jnp.dot(w_ref[...], xcol_ref[...], preferred_element_type=jnp.float32)
    conv_ref[...] = acc.astype(conv_ref.dtype)
    # Both reductions consume the same freshly produced `acc` tile (still
    # register/VMEM resident) -> single traversal, no extra HBM pass.
    s = jnp.sum(acc, axis=1, keepdims=True)                  # (tc, 1)
    sq = jnp.sum(acc * acc, axis=1, keepdims=True)           # (tc, 1)
    stats_ref[...] = jnp.concatenate([s, sq], axis=1)[None]  # (1, tc, 2)


def _bn_act_kernel(conv_ref, params_ref, o_ref):
    """Phase 2: BatchNorm apply (folded scale/shift) + LeakyReLU(0.1).

    conv_ref:   (tile_cout, tile_nhw) conv values (store_dtype)
    params_ref: (tile_cout, 2)        column 0 = scale, column 1 = shift (f32)
    o_ref:      (tile_cout, tile_nhw) output (f32)
    """
    p = params_ref[...]
    scale = p[:, 0:1]
    shift = p[:, 1:2]
    y = conv_ref[...].astype(jnp.float32) * scale + shift
    # LeakyReLU(0.1) = max(y, 0.1*y) (valid since slope < 1).
    # Dropout(p=0.0) and MaxPool2d(kernel_size=stride=1, ceil_mode=True) are
    # identities with the module's default constructor args.
    o_ref[...] = jnp.maximum(y, LEAKY_SLOPE * y).astype(o_ref.dtype)


def _largest_tile(total, cap, quantum):
    """Largest t <= cap that divides `total` and is a multiple of `quantum`
    (falls back to the full extent, which is always BlockSpec-legal)."""
    if total <= cap:
        return total
    t = (cap // quantum) * quantum
    while t >= quantum:
        if total % t == 0:
            return t
        t -= quantum
    return total


def osl_block2(x, conv_w, bn_gamma, bn_beta, *,
               tile_cout=None, tile_nhw=None,
               mxu_dtype=jnp.bfloat16, store_dtype=jnp.bfloat16):
    """x: (N, Cin, H, W) NCHW.  Returns (N, Cout, H, W) float32.

    mxu_dtype:   MXU operand dtype (bf16 default; pass f32 for tight tolerances).
    store_dtype: dtype of the conv intermediate between the two kernels.
    """
    N, Cin, H, W = x.shape
    Cout = conv_w.shape[0]
    NHW = N * H * W
    K = 9 * Cin
    # TODO(synk): if NHW ever needs lane padding, mask padded columns out of the
    # BN partial sums and out of the 1/NHW count (otherwise batch stats bias).
    assert NHW % 128 == 0, "flattened N*H*W must be a multiple of 128 (lane-dense)"

    if tile_cout is None:
        tile_cout = _largest_tile(Cout, 256, 8)     # fill MXU M rows
    if tile_nhw is None:
        tile_nhw = _largest_tile(NHW, 2048, 128)    # lane-dense streaming tiles
    assert Cout % tile_cout == 0 and NHW % tile_nhw == 0
    n_cout = Cout // tile_cout
    n_nhw = NHW // tile_nhw

    # --- wrapper-side im2col; cast BEFORE stacking so the 9x slab is bf16 ---
    x_lo = x.astype(mxu_dtype)
    x_pad = jnp.pad(x_lo, ((0, 0), (0, 0), (1, 1), (1, 1)))   # (N,Cin,H+2,W+2)
    x_t = jnp.transpose(x_pad, (1, 0, 2, 3))                  # (Cin,N,H+2,W+2)
    cols = jnp.stack([x_t[:, :, kh:kh + H, kw:kw + W]
                      for kh in range(3) for kw in range(3)], axis=0)
    x_col = cols.reshape(K, NHW)                              # (9*Cin, NHW)
    # TODO(synk): for v5e (lowest HBM BW) a variant forming the 9 taps from a
    # VMEM-resident padded tile would avoid the 9x im2col HBM amplification.

    # weights: (Cout,Cin,3,3) -> (Cout,kh,kw,Cin) -> (Cout, 9*Cin); K-order
    # (tap, cin) matches the im2col slab's row order.
    w_k = jnp.transpose(conv_w, (0, 2, 3, 1)).reshape(Cout, K).astype(mxu_dtype)

    # --- explicit scoped-VMEM limit from the actual (double-buffered) tiles ---
    itm = jnp.dtype(mxu_dtype).itemsize
    its = jnp.dtype(store_dtype).itemsize
    fp1 = 2 * (K * tile_nhw * itm + tile_cout * K * itm
               + tile_cout * tile_nhw * its + tile_cout * 128 * 4)
    fp2 = 2 * (tile_cout * tile_nhw * its + tile_cout * 128 * 4
               + tile_cout * tile_nhw * 4)
    vmem_limit = int(min(max(1.5 * max(fp1, fp2) + (4 << 20), 16 << 20), 64 << 20))
    cparams = pltpu.CompilerParams(
        dimension_semantics=("parallel", "parallel"),
        vmem_limit_bytes=vmem_limit)

    # ---- phase 1: conv + per-tile partial BN statistics --------------------
    conv_flat, part_stats = pl.pallas_call(
        _conv_stats_kernel,
        out_shape=(jax.ShapeDtypeStruct((Cout, NHW), store_dtype),
                   jax.ShapeDtypeStruct((n_nhw, Cout, 2), jnp.float32)),
        grid=(n_cout, n_nhw),
        in_specs=[
            pl.BlockSpec((K, tile_nhw), lambda i, j: (0, j)),
            pl.BlockSpec((tile_cout, K), lambda i, j: (i, 0)),
        ],
        out_specs=(
            pl.BlockSpec((tile_cout, tile_nhw), lambda i, j: (i, j)),
            pl.BlockSpec((1, tile_cout, 2), lambda i, j: (j, i, 0)),
        ),
        compiler_params=cparams,
    )(x_col, w_k)

    # ---- tiny wrapper reduction + fold of the BN affine --------------------
    sums = jnp.sum(part_stats, axis=0)                        # (Cout, 2)
    mean = sums[:, 0] / NHW
    # one-pass variance E[x^2]-E[x]^2 in f32 (acceptable here: conv has no bias,
    # so mean^2 << E[x^2]).
    var = jnp.maximum(sums[:, 1] / NHW - mean * mean, 0.0)
    scale = bn_gamma.astype(jnp.float32) * lax.rsqrt(var + BN_EPS)
    shift = bn_beta.astype(jnp.float32) - mean * scale
    params = jnp.stack([scale, shift], axis=1)                # (Cout, 2)

    # ---- phase 2: normalize + LeakyReLU -------------------------------------
    out_flat = pl.pallas_call(
        _bn_act_kernel,
        out_shape=jax.ShapeDtypeStruct((Cout, NHW), jnp.float32),
        grid=(n_cout, n_nhw),
        in_specs=[
            pl.BlockSpec((tile_cout, tile_nhw), lambda i, j: (i, j)),
            pl.BlockSpec((tile_cout, 2), lambda i, j: (i, 0)),
        ],
        out_specs=pl.BlockSpec((tile_cout, tile_nhw), lambda i, j: (i, j)),
        compiler_params=cparams,
    )(conv_flat, params)

    # Back to NCHW.
    return out_flat.reshape(Cout, N, H, W).transpose(1, 0, 2, 3)


def reference(x, conv_w, bn_gamma, bn_beta):
    """Pure-JAX reference mirroring the PyTorch OSL_Block2 forward (defaults)."""
    out = lax.conv_general_dilated(
        x.astype(jnp.float32), conv_w.astype(jnp.float32),
        window_strides=(1, 1), padding=[(1, 1), (1, 1)],
        dimension_numbers=("NCHW", "OIHW", "NCHW"))
    mean = jnp.mean(out, axis=(0, 2, 3), keepdims=True)
    var = jnp.mean((out - mean) ** 2, axis=(0, 2, 3), keepdims=True)
    out = (out - mean) * lax.rsqrt(var + BN_EPS)
    out = out * bn_gamma.reshape(1, -1, 1, 1) + bn_beta.reshape(1, -1, 1, 1)
    out = jnp.where(out >= 0, out, LEAKY_SLOPE * out)
    return out


if __name__ == "__main__":
    key = jax.random.PRNGKey(0)
    k_x, k_w = jax.random.split(key)

    N, Cin, H, W = 2, 4, 16, 16      # inplanes=4
    Cout = 8                         # planes=8

    x = jax.random.normal(k_x, (N, Cin, H, W), dtype=jnp.float32)
    conv_w = 0.1 * jax.random.normal(k_w, (Cout, Cin, 3, 3), dtype=jnp.float32)
    bn_gamma = 1.0 + 0.1 * jnp.arange(Cout, dtype=jnp.float32)
    bn_beta = 0.01 * jnp.arange(Cout, dtype=jnp.float32)

    ref = jax.block_until_ready(reference(x, conv_w, bn_gamma, bn_beta))

    # Tight correctness check with f32 MXU inputs / f32 intermediate.
    out_f32 = jax.block_until_ready(
        osl_block2(x, conv_w, bn_gamma, bn_beta,
                   mxu_dtype=jnp.float32, store_dtype=jnp.float32))
    assert out_f32.shape == (N, Cout, H, W)
    assert jnp.allclose(out_f32, ref, rtol=1e-4, atol=1e-4), (
        "f32 path mismatch: max|diff|=%e"
        % float(jnp.max(jnp.abs(out_f32 - ref))))

    # Default (bf16 MXU inputs + bf16 intermediate): looser tolerance vs the
    # f32 reference, as recommended by the perf review.
    out = jax.block_until_ready(osl_block2(x, conv_w, bn_gamma, bn_beta))
    assert out.shape == (N, Cout, H, W)
    assert jnp.allclose(out, ref, rtol=5e-2, atol=5e-2), (
        "bf16 path mismatch: max|diff|=%e"
        % float(jnp.max(jnp.abs(out - ref))))

    print("KERNEL_OK")
</pallas_src>

<mosaic_0001>
module attributes {stable_mosaic.version = 11 : i64} {
  func.func @_conv_stats_kernel(%arg0: i32, %arg1: i32, %arg2: memref<36x512xf32, #tpu.memory_space<vmem>>, %arg3: memref<8x36xf32, #tpu.memory_space<vmem>>, %arg4: memref<8x512xf32, #tpu.memory_space<vmem>>, %arg5: memref<1x8x2xf32, #tpu.memory_space<vmem>>) attributes {dimension_semantics = [#tpu.dimension_semantics<parallel>, #tpu.dimension_semantics<parallel>], iteration_bounds = array<i64: 1, 1>, scalar_prefetch = 0 : i64, scratch_operands = 0 : i64, tpu.core_type = #tpu.core_type<tc>, window_params = [{transform_indices = @transform_0, window_bounds = array<i64: 36, 512>}, {transform_indices = @transform_1, window_bounds = array<i64: 8, 36>}, {transform_indices = @transform_2, window_bounds = array<i64: 8, 512>}, {transform_indices = @transform_3, window_bounds = array<i64: 1, 8, 2>}]} {
    %c0 = arith.constant 0 : index
    %c0_0 = arith.constant 0 : index
    %0 = vector.load %arg3[%c0, %c0_0] : memref<8x36xf32, #tpu.memory_space<vmem>>, vector<8x36xf32>
    %c0_1 = arith.constant 0 : index
    %c0_2 = arith.constant 0 : index
    %1 = vector.load %arg2[%c0_1, %c0_2] : memref<36x512xf32, #tpu.memory_space<vmem>>, vector<36x512xf32>
    %cst = arith.constant dense<0.000000e+00> : vector<8x512xf32>
    %2 = tpu.matmul %0, %1, %cst {dimension_numbers = #tpu.dot_dimension_numbers<[1], [0], [0], [1], [0, 0, 1, 1], [], []>} : vector<8x36xf32>, vector<36x512xf32>, vector<8x512xf32> -> vector<8x512xf32>
    %c0_3 = arith.constant 0 : index
    %c0_4 = arith.constant 0 : index
    %3 = vector.load %arg4[%c0_3, %c0_4] : memref<8x512xf32, #tpu.memory_space<vmem>>, vector<8x512xf32>
    tpu.vector_store %arg4[%c0_3, %c0_4], %2 {strides = array<i32>} : memref<8x512xf32, #tpu.memory_space<vmem>>, vector<8x512xf32>,
    %cst_5 = arith.constant dense<0.000000e+00> : vector<8xf32>
    %4 = vector.multi_reduction <add>, %2, %cst_5 [1] : vector<8x512xf32> to vector<8xf32>
    %5 = vector.shape_cast %4 : vector<8xf32> to vector<8x1xf32>
    %6 = arith.mulf %2, %2 : vector<8x512xf32>
    %cst_6 = arith.constant dense<0.000000e+00> : vector<8xf32>
    %7 = vector.multi_reduction <add>, %6, %cst_6 [1] : vector<8x512xf32> to vector<8xf32>
    %8 = vector.shape_cast %7 : vector<8xf32> to vector<8x1xf32>
    %9 = tpu.concatenate %5, %8 in 1 : vector<8x1xf32>, vector<8x1xf32> -> vector<8x2xf32>
    %10 = vector.shape_cast %9 : vector<8x2xf32> to vector<1x8x2xf32>
    %c0_7 = arith.constant 0 : index
    %c0_8 = arith.constant 0 : index
    %c0_9 = arith.constant 0 : index
    %11 = vector.load %arg5[%c0_7, %c0_8, %c0_9] : memref<1x8x2xf32, #tpu.memory_space<vmem>>, vector<1x8x2xf32>
    tpu.vector_store %arg5[%c0_7, %c0_8, %c0_9], %10 {strides = array<i32>} : memref<1x8x2xf32, #tpu.memory_space<vmem>>, vector<1x8x2xf32>,
    return
  }
  func.func @transform_0(%arg0: i32, %arg1: i32) -> (i32, i32) {
    %c0_i32 = arith.constant 0 : i32
    %c0_i32_0 = arith.constant 0 : i32
    return %c0_i32, %arg1 : i32, i32
  }
  func.func @transform_1(%arg0: i32, %arg1: i32) -> (i32, i32) {
    %c0_i32 = arith.constant 0 : i32
    %c0_i32_0 = arith.constant 0 : i32
    return %arg0, %c0_i32 : i32, i32
  }
  func.func @transform_2(%arg0: i32, %arg1: i32) -> (i32, i32) {
    %c0_i32 = arith.constant 0 : i32
    return %arg0, %arg1 : i32, i32
  }
  func.func @transform_3(%arg0: i32, %arg1: i32) -> (i32, i32, i32) {
    %c0_i32 = arith.constant 0 : i32
    %c0_i32_0 = arith.constant 0 : i32
    return %arg1, %arg0, %c0_i32 : i32, i32, i32
  }
}

</mosaic_0001>

<llo_original>
// kernel: tpu_custom_call.1
$region0: #{tpu_custom_call.1}
  #allocation0 [shape = 'u32[]', space=smem, size = 0x4, offset = 0x4, fixed_abs, tag = 'smem constant byte address 0x4 - core index']
  #allocation1 [shape = 'u32[72,128]{1,0:T(1,128)}', space=vmem, size = 0x9000, scoped, tag = 'internal scratch']
  %s0 = inlined_call_operand.hbm [shape: f32[36,512], index: 0, kind: input, shape index: {}]
  %s1 = inlined_call_operand.hbm [shape: f32[8,36], index: 1, kind: input, shape index: {}]
  %s2 = inlined_call_operand.hbm [shape: f32[8,512], index: 2, kind: output, shape index: {0}]
  %s3 = inlined_call_operand.vmem [shape: f32[1,8,2], index: 3, kind: output, shape index: {1}]
  %4 = xla_tuple %s2, %s3
  %s5 = sld [smem:[#allocation0]]
  $region34: #{tpu_custom_call.1} parent=0
    _
  %s7 = ssub.s32 1, %s5
  %s8 = scalar_select 0, %s7, %s5
  $region1: #{tpu_custom_call.1} parent=0
    #allocation2 [shape = 'u8[81920]{0}', space=vmem, size = 0x14000, scoped, tag = 'input window, operand 0, single buffered']
    #allocation3 [shape = 's32[1]{0}', space=sflag, size = 0x4, scoped, tag = 'scoped memory for tpu_custom_call.1']
    #allocation4 [shape = 's32[1]{0}', space=sflag, size = 0x4, scoped, tag = 'scoped memory for tpu_custom_call.1']
    #allocation5 [shape = 'u8[4096]{0}', space=vmem, size = 0x1000, scoped, tag = 'input window, operand 1, single buffered']
    #allocation6 [shape = 's32[1]{0}', space=sflag, size = 0x4, scoped, tag = 'scoped memory for tpu_custom_call.1']
    #allocation7 [shape = 'u8[16384]{0}', space=vmem, size = 0x4000, scoped, tag = 'output window, operand 0, single buffered']
    %9 = vsyncpa [#allocation3], 0
    %10 = vsyncpa [#allocation6], 0
    %11 = vsyncpa [#allocation4], 0
    // Predicated region
    $region2: #{tpu_custom_call.1} parent=1 // pred_check
      _
    $region3: #{tpu_custom_call.1} parent=1 // pred_check_branch
      %13 = sbr.rel (0) target = $region5
    $region4: #{tpu_custom_call.1} parent=1 // pred_region
      %15 = vsyncadd [#allocation3], 0
      %s16 = sshll.u32 %s0, 4
      %s17 = int_to_ptr.hbm [resolvable:$true] %s16
      %s18 = sshll.u32 [#allocation2], 4
      %s19 = int_to_ptr.vmem [resolvable:$true] %s18
      %24 = dma.hbm_to_vmem [thread:$0]  %s17, 2560, %s19, [#allocation3], 512, 512, 32
    $region5: #{tpu_custom_call.1} parent=1 // pred_fallthru
      _
    // Predicated region
    $region6: #{tpu_custom_call.1} parent=1 // pred_check
      _
    $region7: #{tpu_custom_call.1} parent=1 // pred_check_branch
      %26 = sbr.rel (0) target = $region9
    $region8: #{tpu_custom_call.1} parent=1 // pred_region
      %28 = vsyncadd [#allocation6], 0
      %s30 = sshll.u32 %s1, 4
      %s31 = int_to_ptr.hbm [resolvable:$true] %s30
      %s32 = sshll.u32 [#allocation5], 4
      %s33 = int_to_ptr.vmem [resolvable:$true] %s32
      %35 = dma.hbm_to_vmem [thread:$0]  %s31, 128, %s33, [#allocation6]
    $region9: #{tpu_custom_call.1} parent=1 // pred_fallthru
      _
    // Predicated region
    $region10: #{tpu_custom_call.1} parent=1 // pred_check
      _
    $region11: #{tpu_custom_call.1} parent=1 // pred_check_branch
      %37 = sbr.rel (0) target = $region13
    $region12: #{tpu_custom_call.1} parent=1 // pred_region
      %39 = dma.done [#allocation3], 2560
    $region13: #{tpu_custom_call.1} parent=1 // pred_fallthru
      _
    // Predicated region
    $region14: #{tpu_custom_call.1} parent=1 // pred_check
      _
    $region15: #{tpu_custom_call.1} parent=1 // pred_check_branch
      %41 = sbr.rel (0) target = $region17
    $region16: #{tpu_custom_call.1} parent=1 // pred_region
      %43 = dma.done [#allocation6], 128
    $region17: #{tpu_custom_call.1} parent=1 // pred_fallthru
      _
    %v44 = vld [vmem:[#allocation5] sm:$0xff]
    %v45 = vld [vmem:[#allocation2] sm:$0xff]
    %v46 = vld [vmem:[#allocation2 + $0x8] sm:$0xff]
    %v47 = vld [vmem:[#allocation2 + $0x10] sm:$0xff]
    %v48 = vld [vmem:[#allocation2 + $0x18] sm:$0xff]
    %v49 = vld [vmem:[#allocation2 + $0x20] sm:$0xff]
    %v50 = vld [vmem:[#allocation2 + $0x28] sm:$0xff]
    %v51 = vld [vmem:[#allocation2 + $0x30] sm:$0xff]
    %v52 = vld [vmem:[#allocation2 + $0x38] sm:$0xff]
    %v53 = vld [vmem:[#allocation2 + $0x40] sm:$0xff]
    %v54 = vld [vmem:[#allocation2 + $0x48] sm:$0xff]
    %v55 = vld [vmem:[#allocation2 + $0x50] sm:$0xff]
    %v56 = vld [vmem:[#allocation2 + $0x58] sm:$0xff]
    %v57 = vld [vmem:[#allocation2 + $0x60] sm:$0xff]
    %v58 = vld [vmem:[#allocation2 + $0x68] sm:$0xff]
    %v59 = vld [vmem:[#allocation2 + $0x70] sm:$0xff]
    %v60 = vld [vmem:[#allocation2 + $0x78] sm:$0xff]
    %v61 = vld [vmem:[#allocation2 + $0x80] sm:$0xf]
    %v62 = vld [vmem:[#allocation2 + $0x88] sm:$0xf]
    %v63 = vld [vmem:[#allocation2 + $0x90] sm:$0xf]
    %v64 = vld [vmem:[#allocation2 + $0x98] sm:$0xf]
    %vm65 = vcmask 293888
    %v67 = vsel %vm65, %v44, 0
    %vm69 = vcmask 1043456
    %v71 = vsel %vm69, %v61, 0
    %v74 = vsel %vm69, %v62, 0
    %v77 = vsel %vm69, %v63, 0
    %v80 = vsel %vm69, %v64, 0
    %82 = vmatpush.msra.mxu0 0.0
    %83 = vmatpush.msra.mxu0 0.0
    %84 = vmatpush.msra.mxu0 0.0
    %85 = vmatpush.msra.mxu0 0.0
    %86 = vmatpush.msra.mxu0 0.0
    %87 = vmatpush.msra.mxu0 0.0
    %88 = vmatpush.msra.mxu0 0.0
    %89 = vmatpush.msra.mxu0 0.0
    %90 = vmatpush.msra.mxu0 0.0
    %91 = vmatpush.msra.mxu0 0.0
    %92 = vmatpush.msra.mxu0 0.0
    %93 = vmatpush.msra.mxu0 %v71
    %94 = vmatpush.msra.mxu0 %v57
    %95 = vmatpush.msra.mxu0 %v53
    %96 = vmatpush.msra.mxu0 %v49
    %97 = vmatpush.msra.mxu0 %v45
    %98 = vmatmul.f32.gmra.mxu0 %v67
    %v99 = vpop.f32.mrf.mxu0
    %v100 = vadd.f32 0.0, %v99
    %101 = vdwg.mxu0
    %102 = vmatpush.msra.mxu0 0.0
    %103 = vmatpush.msra.mxu0 0.0
    %104 = vmatpush.msra.mxu0 0.0
    %105 = vmatpush.msra.mxu0 0.0
    %106 = vmatpush.msra.mxu0 0.0
    %107 = vmatpush.msra.mxu0 0.0
    %108 = vmatpush.msra.mxu0 0.0
    %109 = vmatpush.msra.mxu0 0.0
    %110 = vmatpush.msra.mxu0 0.0
    %111 = vmatpush.msra.mxu0 0.0
    %112 = vmatpush.msra.mxu0 0.0
    %113 = vmatpush.msra.mxu0 %v74
    %114 = vmatpush.msra.mxu0 %v58
    %115 = vmatpush.msra.mxu0 %v54
    %116 = vmatpush.msra.mxu0 %v50
    %117 = vmatpush.msra.mxu0 %v46
    %118 = vmatmul.f32.gmra.mxu0 %v67
    %v119 = vpop.f32.mrf.mxu0
    %v120 = vadd.f32 0.0, %v119
    %121 = vdwg.mxu0
    %122 = vmatpush.msra.mxu0 0.0
    %123 = vmatpush.msra.mxu0 0.0
    %124 = vmatpush.msra.mxu0 0.0
    %125 = vmatpush.msra.mxu0 0.0
    %126 = vmatpush.msra.mxu0 0.0
    %127 = vmatpush.msra.mxu0 0.0
    %128 = vmatpush.msra.mxu0 0.0
    %129 = vmatpush.msra.mxu0 0.0
    %130 = vmatpush.msra.mxu0 0.0
    %131 = vmatpush.msra.mxu0 0.0
    %132 = vmatpush.msra.mxu0 0.0
    %133 = vmatpush.msra.mxu0 %v77
    %134 = vmatpush.msra.mxu0 %v59
    %135 = vmatpush.msra.mxu0 %v55
    %136 = vmatpush.msra.mxu0 %v51
    %137 = vmatpush.msra.mxu0 %v47
    %138 = vmatmul.f32.gmra.mxu0 %v67
    %v139 = vpop.f32.mrf.mxu0
    %v140 = vadd.f32 0.0, %v139
    %141 = vdwg.mxu0
    %142 = vmatpush.msra.mxu0 0.0
    %143 = vmatpush.msra.mxu0 0.0
    %144 = vmatpush.msra.mxu0 0.0
    %145 = vmatpush.msra.mxu0 0.0
    %146 = vmatpush.msra.mxu0 0.0
    %147 = vmatpush.msra.mxu0 0.0
    %148 = vmatpush.msra.mxu0 0.0
    %149 = vmatpush.msra.mxu0 0.0
    %150 = vmatpush.msra.mxu0 0.0
    %151 = vmatpush.msra.mxu0 0.0
    %152 = vmatpush.msra.mxu0 0.0
    %153 = vmatpush.msra.mxu0 %v80
    %154 = vmatpush.msra.mxu0 %v60
    %155 = vmatpush.msra.mxu0 %v56
    %156 = vmatpush.msra.mxu0 %v52
    %157 = vmatpush.msra.mxu0 %v48
    %158 = vmatmul.f32.gmra.mxu0 %v67
    %v159 = vpop.f32.mrf.mxu0
    %v160 = vadd.f32 0.0, %v159
    %161 = vdwg.mxu0
    %162 = vst [vmem:[#allocation7] sm:$0xff] %v100
    %163 = vst [vmem:[#allocation7 + $0x8] sm:$0xff] %v120
    %164 = vst [vmem:[#allocation7 + $0x10] sm:$0xff] %v140
    %165 = vst [vmem:[#allocation7 + $0x18] sm:$0xff] %v160
    %v166 = vadd.f32 %v100, %v120
    %v167 = vadd.f32 %v166, %v140
    %v168 = vadd.f32 %v167, %v160
    %169 = vadd.xlane.f32.xlu0 %v168
    %v170 = vpop.xlane.xlu0 %169
    %v171 = vmul.f32 %v100, %v100
    %v172 = vmul.f32 %v120, %v120
    %v173 = vmul.f32 %v140, %v140
    %v174 = vmul.f32 %v160, %v160
    %v175 = vadd.f32 %v171, %v172
    %v176 = vadd.f32 %v175, %v173
    %v177 = vadd.f32 %v176, %v174
    %178 = vadd.xlane.f32.xlu0 %v177
    %v179 = vpop.xlane.xlu0 %178
    %vm180 = vcmask 7168
    %v181 = vsel %vm180, %v170, %v179
    %vm182 = vcmask 15360
    %183 = vst.msk [vmem:[%s3] sm:$0xff] %vm182, %v181
    // Predicated region
    $region18: #{tpu_custom_call.1} parent=1 // pred_check
      _
    $region19: #{tpu_custom_call.1} parent=1 // pred_check_branch
      %185 = sbr.rel (0) target = $region21
    $region20: #{tpu_custom_call.1} parent=1 // pred_region
      %187 = vsyncadd [#allocation4], 0
      %s189 = sshll.u32 [#allocation7], 4
      %s190 = int_to_ptr.vmem [resolvable:$true] %s189
      %s191 = sshll.u32 %s2, 4
      %s192 = int_to_ptr.hbm [resolvable:$true] %s191
      %194 = dma.vmem_to_hbm [thread:$0]  %s190, 512, %s192, [#allocation4]
    $region21: #{tpu_custom_call.1} parent=1 // pred_fallthru
      _
    // Predicated region
    $region22: #{tpu_custom_call.1} parent=1 // pred_check
      _
    $region23: #{tpu_custom_call.1} parent=1 // pred_check_branch
      %196 = sbr.rel (0) target = $region25
    $region24: #{tpu_custom_call.1} parent=1 // pred_region
      _
    $region25: #{tpu_custom_call.1} parent=1 // pred_fallthru
      _
    // Predicated region
    $region26: #{tpu_custom_call.1} parent=1 // pred_check
      _
    $region27: #{tpu_custom_call.1} parent=1 // pred_check_branch
      %198 = sbr.rel (0) target = $region29
    $region28: #{tpu_custom_call.1} parent=1 // pred_region
      %200 = dma.done [#allocation4], 512
    $region29: #{tpu_custom_call.1} parent=1 // pred_fallthru
      _
    // Predicated region
    $region30: #{tpu_custom_call.1} parent=1 // pred_check
      _
    $region31: #{tpu_custom_call.1} parent=1 // pred_check_branch
      %202 = sbr.rel (0) target = $region33
    $region32: #{tpu_custom_call.1} parent=1 // pred_region
      _
    $region33: #{tpu_custom_call.1} parent=1 // pred_fallthru
      _
    %203 = vsyncpa [#allocation3], 1
    %204 = vsyncpa [#allocation6], 1
    %205 = vsyncpa [#allocation4], 1

</llo_original>
